<compile_context>
chip_gen: v7x
topology: tpu7x:2x2x1
jax: 0.10.0
libtpu: 0.0.40
codegen_flags: <defaults>
</compile_context>

<pallas_src>
import functools
import math

import jax
import jax.numpy as jnp
import numpy as np
from jax.experimental import pallas as pl
from jax.experimental.pallas import tpu as pltpu

STATE_DIM = 16
ACTION_DIM = 6
HIDDEN = 64
ACTION_STD_INIT = 0.6
_LOG_2PI = math.log(2.0 * math.pi)


def _round_up(x, m):
    return ((x + m - 1) // m) * m


# ---------------------------------------------------------------------------
# Pallas kernels
# ---------------------------------------------------------------------------
def _critic_value_kernel(state_ref, action_ref, inv_var_ref, const_ref,
                         w1_ref, b1_ref, w2_ref, b2_ref, w3_ref, b3_ref,
                         out_ref, *, action_dim):
    """Fused actor+critic MLP + diagonal-MVN log_prob, packed output."""
    x = state_ref[...]                                            # [TB, S]

    # Fused L1/L2/L3 (actor and critic share the 128-lane matmuls; W2 is
    # block-diagonal and W3 routes actor -> cols 0..A-1, critic -> col A).
    h = jnp.tanh(jnp.dot(x, w1_ref[...],
                         preferred_element_type=jnp.float32) + b1_ref[...])
    h = jnp.tanh(jnp.dot(h, w2_ref[...],
                         preferred_element_type=jnp.float32) + b2_ref[...])
    o3 = jnp.dot(h, w3_ref[...],
                 preferred_element_type=jnp.float32) + b3_ref[...]  # [TB, A+1]

    mean = jnp.tanh(o3[:, :action_dim])                 # actor head (Tanh)
    value = o3[:, action_dim:action_dim + 1]            # critic head (no Tanh)

    # log N(action; mean, diag(var)) with 1/var and the constant precomputed.
    diff = action_ref[...] - mean
    maha = jnp.sum(diff * diff * inv_var_ref[...], axis=-1, keepdims=True)
    logp = const_ref[...] - 0.5 * maha                  # [TB, 1]

    out_ref[:, 0:action_dim] = mean
    out_ref[:, action_dim:action_dim + 1] = logp
    out_ref[:, action_dim + 1:action_dim + 2] = value


def _actor_policy_kernel(state_ref, noise_ref, std_ref, inv_var_ref, const_ref,
                         w1_ref, b1_ref, w2_ref, b2_ref, w3_ref, b3_ref,
                         out_ref, *, action_dim):
    """Actor MLP + Gaussian sample + log_prob in a single pass (actor weights
    only — no wasted critic compute)."""
    x = state_ref[...]
    h = jnp.tanh(jnp.dot(x, w1_ref[...],
                         preferred_element_type=jnp.float32) + b1_ref[...])
    h = jnp.tanh(jnp.dot(h, w2_ref[...],
                         preferred_element_type=jnp.float32) + b2_ref[...])
    mean = jnp.tanh(jnp.dot(h, w3_ref[...],
                            preferred_element_type=jnp.float32) + b3_ref[...])

    action = mean + std_ref[...] * noise_ref[...]
    diff = action - mean
    maha = jnp.sum(diff * diff * inv_var_ref[...], axis=-1, keepdims=True)
    logp = const_ref[...] - 0.5 * maha

    out_ref[:, 0:action_dim] = action
    out_ref[:, action_dim:action_dim + 1] = logp


# ---------------------------------------------------------------------------
# Parameter init (PyTorch nn.Linear default U(-1/sqrt(fan_in), 1/sqrt(fan_in)))
# and one-time fused packing.
# ---------------------------------------------------------------------------
def init_params(key, state_dim, action_dim):
    layer_dims = [
        (state_dim, HIDDEN), (HIDDEN, HIDDEN), (HIDDEN, action_dim),   # actor
        (state_dim, HIDDEN), (HIDDEN, HIDDEN), (HIDDEN, 1),            # critic
    ]
    keys = jax.random.split(key, 2 * len(layer_dims))
    params = []
    for idx, (fan_in, fan_out) in enumerate(layer_dims):
        bound = 1.0 / math.sqrt(float(fan_in))
        w = jax.random.uniform(keys[2 * idx], (fan_in, fan_out),
                               jnp.float32, -bound, bound)
        b = jax.random.uniform(keys[2 * idx + 1], (1, fan_out),
                               jnp.float32, -bound, bound)
        params += [w, b]
    return tuple(params)


def prepare_params(raw_params):
    """Pack actor+critic weights into fused 128-lane matrices (done once)."""
    (w1a, b1a, w2a, b2a, w3a, b3a,
     w1c, b1c, w2c, b2c, w3c, b3c) = raw_params
    H = HIDDEN
    A = w3a.shape[1]
    w1 = jnp.concatenate([w1a, w1c], axis=1)                     # [S, 2H]
    b1 = jnp.concatenate([b1a, b1c], axis=1)                     # [1, 2H]
    w2 = jnp.zeros((2 * H, 2 * H), jnp.float32)
    w2 = w2.at[:H, :H].set(w2a).at[H:, H:].set(w2c)              # block-diag
    b2 = jnp.concatenate([b2a, b2c], axis=1)                     # [1, 2H]
    w3 = jnp.zeros((2 * H, A + 1), jnp.float32)
    w3 = w3.at[:H, :A].set(w3a).at[H:, A:].set(w3c)              # [2H, A+1]
    b3 = jnp.concatenate([b3a, b3c], axis=1)                     # [1, A+1]
    return {
        "fused": (w1, b1, w2, b2, w3, b3),
        "actor": (w1a, b1a, w2a, b2a, w3a, b3a),
    }


# ---------------------------------------------------------------------------
# Wrappers
# ---------------------------------------------------------------------------
def _mvn_const(action_var):
    """-0.5*(k*log(2pi) + log|Sigma|) — batch-independent, hoisted out."""
    k = action_var.shape[0]
    log_det = jnp.sum(jnp.log(action_var))
    const = -0.5 * (k * _LOG_2PI + log_det)
    return const, log_det


def _batch_tile(batch, tile_b):
    tb = min(tile_b, _round_up(max(batch, 1), 8))
    return tb, _round_up(batch, tb)


def critic_value(state, action, action_var, prepared, *, tile_b=256):
    """Equivalent of Actor_crtic_network.Critic_value (also returns the mean).

    Returns (action_logprobs [B], state_values [B,1], dist_entropy [B],
             action_mean [B, A]).
    """
    B, S = state.shape
    A = action.shape[-1]
    tb, B_pad = _batch_tile(B, tile_b)
    if B_pad != B:
        state = jnp.pad(state, ((0, B_pad - B), (0, 0)))
        action = jnp.pad(action, ((0, B_pad - B), (0, 0)))

    inv_var = (1.0 / action_var).reshape(1, A).astype(jnp.float32)
    const, log_det = _mvn_const(action_var)
    const2d = const.reshape(1, 1).astype(jnp.float32)

    w1, b1, w2, b2, w3, b3 = prepared["fused"]
    H2 = w1.shape[1]

    def batch_spec(feat):
        return pl.BlockSpec((tb, feat), lambda i: (i, 0))

    def full_spec(r, c):
        return pl.BlockSpec((r, c), lambda i: (0, 0))

    out = pl.pallas_call(
        functools.partial(_critic_value_kernel, action_dim=A),
        out_shape=jax.ShapeDtypeStruct((B_pad, A + 2), jnp.float32),
        grid_spec=pltpu.PrefetchScalarGridSpec(
            num_scalar_prefetch=0,
            grid=(B_pad // tb,),
            in_specs=[
                batch_spec(S),                    # state
                batch_spec(A),                    # action
                full_spec(1, A),                  # 1/var
                full_spec(1, 1),                  # log-prob constant
                full_spec(S, H2), full_spec(1, H2),        # fused L1
                full_spec(H2, H2), full_spec(1, H2),       # fused L2 (block-diag)
                full_spec(H2, A + 1), full_spec(1, A + 1), # fused L3
            ],
            out_specs=batch_spec(A + 2),          # packed (mean | logp | value)
        ),
        compiler_params=pltpu.CompilerParams(
            dimension_semantics=("parallel",)),
    )(state, action, inv_var, const2d, w1, b1, w2, b2, w3, b3)

    mean = out[:B, :A]
    logp = out[:B, A]
    value = out[:B, A + 1:A + 2]
    # Entropy of a fixed-covariance diagonal Gaussian is batch-independent:
    ent = jnp.full((B,), 0.5 * A * (1.0 + _LOG_2PI) + 0.5 * log_det,
                   jnp.float32)
    return logp, value, ent, mean


def actor_policy(state, action_var, prepared, noise_key, *, tile_b=256):
    """Equivalent of Actor_crtic_network.Actor_policy — single kernel launch.

    Gaussian noise is drawn in the wrapper (glue) and passed in; the MLP,
    sampling and log_prob run fused in one Pallas kernel.
    """
    B, S = state.shape
    A = action_var.shape[0]
    noise = jax.random.normal(noise_key, (B, A), jnp.float32)

    tb, B_pad = _batch_tile(B, tile_b)
    if B_pad != B:
        state = jnp.pad(state, ((0, B_pad - B), (0, 0)))
        noise = jnp.pad(noise, ((0, B_pad - B), (0, 0)))

    std = jnp.sqrt(action_var).reshape(1, A).astype(jnp.float32)
    inv_var = (1.0 / action_var).reshape(1, A).astype(jnp.float32)
    const, _ = _mvn_const(action_var)
    const2d = const.reshape(1, 1).astype(jnp.float32)

    w1, b1, w2, b2, w3, b3 = prepared["actor"]
    H = w1.shape[1]

    def batch_spec(feat):
        return pl.BlockSpec((tb, feat), lambda i: (i, 0))

    def full_spec(r, c):
        return pl.BlockSpec((r, c), lambda i: (0, 0))

    out = pl.pallas_call(
        functools.partial(_actor_policy_kernel, action_dim=A),
        out_shape=jax.ShapeDtypeStruct((B_pad, A + 1), jnp.float32),
        grid_spec=pltpu.PrefetchScalarGridSpec(
            num_scalar_prefetch=0,
            grid=(B_pad // tb,),
            in_specs=[
                batch_spec(S),                    # state
                batch_spec(A),                    # noise
                full_spec(1, A),                  # std
                full_spec(1, A),                  # 1/var
                full_spec(1, 1),                  # log-prob constant
                full_spec(S, H), full_spec(1, H),     # actor L1
                full_spec(H, H), full_spec(1, H),     # actor L2
                full_spec(H, A), full_spec(1, A),     # actor L3
            ],
            out_specs=batch_spec(A + 1),          # packed (action | logp)
        ),
        compiler_params=pltpu.CompilerParams(
            dimension_semantics=("parallel",)),
    )(state, noise, std, inv_var, const2d, w1, b1, w2, b2, w3, b3)

    action = out[:B, :A]
    logp = out[:B, A]
    return action, logp


# ---------------------------------------------------------------------------
# Pure-JAX reference for correctness
# ---------------------------------------------------------------------------
def _ref_critic_value(state, action, action_var, raw_params):
    (w1a, b1a, w2a, b2a, w3a, b3a, w1c, b1c, w2c, b2c, w3c, b3c) = raw_params
    h = jnp.tanh(state @ w1a + b1a)
    h = jnp.tanh(h @ w2a + b2a)
    mean = jnp.tanh(h @ w3a + b3a)
    c = jnp.tanh(state @ w1c + b1c)
    c = jnp.tanh(c @ w2c + b2c)
    value = c @ w3c + b3c
    k = action.shape[-1]
    diff = action - mean
    log_det = jnp.sum(jnp.log(action_var))
    maha = jnp.sum(diff * diff / action_var[None, :], axis=-1)
    logp = -0.5 * (maha + k * _LOG_2PI + log_det)
    ent = jnp.full((state.shape[0],),
                   0.5 * k * (1.0 + _LOG_2PI) + 0.5 * log_det)
    return logp, value, ent, mean


def _check(state, action, action_var, raw_params, prepared, noise_key,
           tile_b):
    B = state.shape[0]
    A = action.shape[-1]

    logp, value, ent, mean = critic_value(state, action, action_var, prepared,
                                          tile_b=tile_b)
    act, act_logp = actor_policy(state, action_var, prepared, noise_key,
                                 tile_b=tile_b)
    jax.block_until_ready((logp, value, ent, mean, act, act_logp))

    r_logp, r_value, r_ent, r_mean = _ref_critic_value(
        state, action, action_var, raw_params)
    np.testing.assert_allclose(np.asarray(logp), np.asarray(r_logp),
                               rtol=1e-5, atol=1e-5)
    np.testing.assert_allclose(np.asarray(value), np.asarray(r_value),
                               rtol=1e-5, atol=1e-5)
    np.testing.assert_allclose(np.asarray(ent), np.asarray(r_ent),
                               rtol=1e-5, atol=1e-5)
    np.testing.assert_allclose(np.asarray(mean), np.asarray(r_mean),
                               rtol=1e-5, atol=1e-5)

    # Actor_policy check: reproduce the noise drawn inside the wrapper.
    noise = jax.random.normal(noise_key, (B, A), jnp.float32)
    exp_act = r_mean + jnp.sqrt(action_var)[None, :] * noise
    diff = exp_act - r_mean
    log_det = jnp.sum(jnp.log(action_var))
    exp_logp = -0.5 * (jnp.sum(diff * diff / action_var[None, :], axis=-1)
                       + A * _LOG_2PI + log_det)
    np.testing.assert_allclose(np.asarray(act), np.asarray(exp_act),
                               rtol=1e-5, atol=1e-5)
    np.testing.assert_allclose(np.asarray(act_logp), np.asarray(exp_logp),
                               rtol=1e-5, atol=1e-4)


if __name__ == "__main__":
    key = jax.random.PRNGKey(0)
    k_param, k_state, k_action, k_noise, k_state2, k_action2, k_noise2 = \
        jax.random.split(key, 7)

    raw_params = init_params(k_param, STATE_DIM, ACTION_DIM)
    prepared = prepare_params(raw_params)
    action_var = jnp.full((ACTION_DIM,),
                          ACTION_STD_INIT * ACTION_STD_INIT, jnp.float32)

    # Small demo batch (pads to one 8-row tile).
    B = 8
    state = jax.random.normal(k_state, (B, STATE_DIM), jnp.float32)
    action = jax.random.normal(k_action, (B, ACTION_DIM), jnp.float32)
    _check(state, action, action_var, raw_params, prepared, k_noise,
           tile_b=256)

    # Larger, non-multiple batch: exercises tile_b=256 tiles, zero-padding and
    # a multi-step parallel grid (keeps both v7x TensorCores busy).
    B2 = 300
    state2 = jax.random.normal(k_state2, (B2, STATE_DIM), jnp.float32)
    action2 = jax.random.normal(k_action2, (B2, ACTION_DIM), jnp.float32)
    _check(state2, action2, action_var, raw_params, prepared, k_noise2,
           tile_b=256)

    # TODO(synk): set_action_std / decay_action_std are host-side scalar
    # bookkeeping (just recompute action_var); no kernel needed.
    print("KERNEL_OK")
</pallas_src>

<mosaic_0001>
module attributes {stable_mosaic.version = 11 : i64} {
  func.func @_critic_value_kernel(%arg0: i32, %arg1: memref<8x16xf32, #tpu.memory_space<vmem>>, %arg2: memref<8x6xf32, #tpu.memory_space<vmem>>, %arg3: memref<1x6xf32, #tpu.memory_space<vmem>>, %arg4: memref<1x1xf32, #tpu.memory_space<vmem>>, %arg5: memref<16x128xf32, #tpu.memory_space<vmem>>, %arg6: memref<1x128xf32, #tpu.memory_space<vmem>>, %arg7: memref<128x128xf32, #tpu.memory_space<vmem>>, %arg8: memref<1x128xf32, #tpu.memory_space<vmem>>, %arg9: memref<128x7xf32, #tpu.memory_space<vmem>>, %arg10: memref<1x7xf32, #tpu.memory_space<vmem>>, %arg11: memref<8x8xf32, #tpu.memory_space<vmem>>) attributes {dimension_semantics = [#tpu.dimension_semantics<parallel>], iteration_bounds = array<i64: 1>, scalar_prefetch = 0 : i64, scratch_operands = 0 : i64, tpu.core_type = #tpu.core_type<tc>, window_params = [{transform_indices = @transform_0, window_bounds = array<i64: 8, 16>}, {transform_indices = @transform_1, window_bounds = array<i64: 8, 6>}, {pipeline_mode = #tpu.pipeline_mode<synchronous>, transform_indices = @transform_2, window_bounds = array<i64: 1, 6>}, {pipeline_mode = #tpu.pipeline_mode<synchronous>, transform_indices = @transform_3, window_bounds = array<i64: 1, 1>}, {pipeline_mode = #tpu.pipeline_mode<synchronous>, transform_indices = @transform_4, window_bounds = array<i64: 16, 128>}, {pipeline_mode = #tpu.pipeline_mode<synchronous>, transform_indices = @transform_5, window_bounds = array<i64: 1, 128>}, {pipeline_mode = #tpu.pipeline_mode<synchronous>, transform_indices = @transform_6, window_bounds = array<i64: 128, 128>}, {pipeline_mode = #tpu.pipeline_mode<synchronous>, transform_indices = @transform_7, window_bounds = array<i64: 1, 128>}, {pipeline_mode = #tpu.pipeline_mode<synchronous>, transform_indices = @transform_8, window_bounds = array<i64: 128, 7>}, {pipeline_mode = #tpu.pipeline_mode<synchronous>, transform_indices = @transform_9, window_bounds = array<i64: 1, 7>}, {transform_indices = @transform_10, window_bounds = array<i64: 8, 8>}]} {
    %c0 = arith.constant 0 : index
    %c0_0 = arith.constant 0 : index
    %0 = vector.load %arg1[%c0, %c0_0] : memref<8x16xf32, #tpu.memory_space<vmem>>, vector<8x16xf32>
    %c0_1 = arith.constant 0 : index
    %c0_2 = arith.constant 0 : index
    %1 = vector.load %arg5[%c0_1, %c0_2] : memref<16x128xf32, #tpu.memory_space<vmem>>, vector<16x128xf32>
    %cst = arith.constant dense<0.000000e+00> : vector<8x128xf32>
    %2 = tpu.matmul %0, %1, %cst {dimension_numbers = #tpu.dot_dimension_numbers<[1], [0], [0], [1], [0, 0, 1, 1], [], []>} : vector<8x16xf32>, vector<16x128xf32>, vector<8x128xf32> -> vector<8x128xf32>
    %c0_3 = arith.constant 0 : index
    %c0_4 = arith.constant 0 : index
    %3 = vector.load %arg6[%c0_3, %c0_4] : memref<1x128xf32, #tpu.memory_space<vmem>>, vector<1x128xf32>
    %4 = vector.broadcast %3 : vector<1x128xf32> to vector<8x128xf32>
    %5 = arith.addf %2, %4 : vector<8x128xf32>
    %6 = math.tanh %5 : vector<8x128xf32>
    %c0_5 = arith.constant 0 : index
    %c0_6 = arith.constant 0 : index
    %7 = vector.load %arg7[%c0_5, %c0_6] : memref<128x128xf32, #tpu.memory_space<vmem>>, vector<128x128xf32>
    %cst_7 = arith.constant dense<0.000000e+00> : vector<8x128xf32>
    %8 = tpu.matmul %6, %7, %cst_7 {dimension_numbers = #tpu.dot_dimension_numbers<[1], [0], [0], [1], [0, 0, 1, 1], [], []>} : vector<8x128xf32>, vector<128x128xf32>, vector<8x128xf32> -> vector<8x128xf32>
    %c0_8 = arith.constant 0 : index
    %c0_9 = arith.constant 0 : index
    %9 = vector.load %arg8[%c0_8, %c0_9] : memref<1x128xf32, #tpu.memory_space<vmem>>, vector<1x128xf32>
    %10 = vector.broadcast %9 : vector<1x128xf32> to vector<8x128xf32>
    %11 = arith.addf %8, %10 : vector<8x128xf32>
    %12 = math.tanh %11 : vector<8x128xf32>
    %c0_10 = arith.constant 0 : index
    %c0_11 = arith.constant 0 : index
    %13 = vector.load %arg9[%c0_10, %c0_11] : memref<128x7xf32, #tpu.memory_space<vmem>>, vector<128x7xf32>
    %cst_12 = arith.constant dense<0.000000e+00> : vector<8x7xf32>
    %14 = tpu.matmul %12, %13, %cst_12 {dimension_numbers = #tpu.dot_dimension_numbers<[1], [0], [0], [1], [0, 0, 1, 1], [], []>} : vector<8x128xf32>, vector<128x7xf32>, vector<8x7xf32> -> vector<8x7xf32>
    %c0_13 = arith.constant 0 : index
    %c0_14 = arith.constant 0 : index
    %15 = vector.load %arg10[%c0_13, %c0_14] : memref<1x7xf32, #tpu.memory_space<vmem>>, vector<1x7xf32>
    %16 = vector.broadcast %15 : vector<1x7xf32> to vector<8x7xf32>
    %17 = arith.addf %14, %16 : vector<8x7xf32>
    %18 = vector.extract_strided_slice %17 {offsets = [0, 0], sizes = [8, 6], strides = [1, 1]} : vector<8x7xf32> to vector<8x6xf32>
    %19 = math.tanh %18 : vector<8x6xf32>
    %20 = vector.extract_strided_slice %17 {offsets = [0, 6], sizes = [8, 1], strides = [1, 1]} : vector<8x7xf32> to vector<8x1xf32>
    %c0_15 = arith.constant 0 : index
    %c0_16 = arith.constant 0 : index
    %21 = vector.load %arg2[%c0_15, %c0_16] : memref<8x6xf32, #tpu.memory_space<vmem>>, vector<8x6xf32>
    %22 = arith.subf %21, %19 : vector<8x6xf32>
    %23 = arith.mulf %22, %22 : vector<8x6xf32>
    %c0_17 = arith.constant 0 : index
    %c0_18 = arith.constant 0 : index
    %24 = vector.load %arg3[%c0_17, %c0_18] : memref<1x6xf32, #tpu.memory_space<vmem>>, vector<1x6xf32>
    %25 = vector.broadcast %24 : vector<1x6xf32> to vector<8x6xf32>
    %26 = arith.mulf %23, %25 : vector<8x6xf32>
    %cst_19 = arith.constant dense<0.000000e+00> : vector<8xf32>
    %27 = vector.multi_reduction <add>, %26, %cst_19 [1] : vector<8x6xf32> to vector<8xf32>
    %28 = vector.shape_cast %27 : vector<8xf32> to vector<8x1xf32>
    %c0_20 = arith.constant 0 : index
    %c0_21 = arith.constant 0 : index
    %29 = vector.load %arg4[%c0_20, %c0_21] : memref<1x1xf32, #tpu.memory_space<vmem>>, vector<1x1xf32>
    %cst_22 = arith.constant 5.000000e-01 : f32
    %30 = vector.broadcast %cst_22 : f32 to vector<8x1xf32>
    %31 = arith.mulf %30, %28 : vector<8x1xf32>
    %32 = vector.broadcast %29 : vector<1x1xf32> to vector<8x1xf32>
    %33 = arith.subf %32, %31 : vector<8x1xf32>
    %c0_23 = arith.constant 0 : index
    %c0_24 = arith.constant 0 : index
    %34 = vector.load %arg11[%c0_23, %c0_24] : memref<8x8xf32, #tpu.memory_space<vmem>>, vector<8x6xf32>
    tpu.vector_store %arg11[%c0_23, %c0_24], %19 {strides = array<i32>} : memref<8x8xf32, #tpu.memory_space<vmem>>, vector<8x6xf32>,
    %c0_25 = arith.constant 0 : index
    %c6 = arith.constant 6 : index
    %35 = vector.load %arg11[%c0_25, %c6] : memref<8x8xf32, #tpu.memory_space<vmem>>, vector<8x1xf32>
    tpu.vector_store %arg11[%c0_25, %c6], %33 {strides = array<i32>} : memref<8x8xf32, #tpu.memory_space<vmem>>, vector<8x1xf32>,
    %c0_26 = arith.constant 0 : index
    %c7 = arith.constant 7 : index
    %36 = vector.load %arg11[%c0_26, %c7] : memref<8x8xf32, #tpu.memory_space<vmem>>, vector<8x1xf32>
    tpu.vector_store %arg11[%c0_26, %c7], %20 {strides = array<i32>} : memref<8x8xf32, #tpu.memory_space<vmem>>, vector<8x1xf32>,
    return
  }
  func.func @transform_0(%arg0: i32) -> (i32, i32) {
    %c0_i32 = arith.constant 0 : i32
    %c0_i32_0 = arith.constant 0 : i32
    return %arg0, %c0_i32 : i32, i32
  }
  func.func @transform_1(%arg0: i32) -> (i32, i32) {
    %c0_i32 = arith.constant 0 : i32
    %c0_i32_0 = arith.constant 0 : i32
    return %arg0, %c0_i32 : i32, i32
  }
  func.func @transform_2(%arg0: i32) -> (i32, i32) {
    %c0_i32 = arith.constant 0 : i32
    %c0_i32_0 = arith.constant 0 : i32
    %c0_i32_1 = arith.constant 0 : i32
    return %c0_i32, %c0_i32_0 : i32, i32
  }
  func.func @transform_3(%arg0: i32) -> (i32, i32) {
    %c0_i32 = arith.constant 0 : i32
    %c0_i32_0 = arith.constant 0 : i32
    %c0_i32_1 = arith.constant 0 : i32
    return %c0_i32, %c0_i32_0 : i32, i32
  }
  func.func @transform_4(%arg0: i32) -> (i32, i32) {
    %c0_i32 = arith.constant 0 : i32
    %c0_i32_0 = arith.constant 0 : i32
    %c0_i32_1 = arith.constant 0 : i32
    return %c0_i32, %c0_i32_0 : i32, i32
  }
  func.func @transform_5(%arg0: i32) -> (i32, i32) {
    %c0_i32 = arith.constant 0 : i32
    %c0_i32_0 = arith.constant 0 : i32
    %c0_i32_1 = arith.constant 0 : i32
    return %c0_i32, %c0_i32_0 : i32, i32
  }
  func.func @transform_6(%arg0: i32) -> (i32, i32) {
    %c0_i32 = arith.constant 0 : i32
    %c0_i32_0 = arith.constant 0 : i32
    %c0_i32_1 = arith.constant 0 : i32
    return %c0_i32, %c0_i32_0 : i32, i32
  }
  func.func @transform_7(%arg0: i32) -> (i32, i32) {
    %c0_i32 = arith.constant 0 : i32
    %c0_i32_0 = arith.constant 0 : i32
    %c0_i32_1 = arith.constant 0 : i32
    return %c0_i32, %c0_i32_0 : i32, i32
  }
  func.func @transform_8(%arg0: i32) -> (i32, i32) {
    %c0_i32 = arith.constant 0 : i32
    %c0_i32_0 = arith.constant 0 : i32
    %c0_i32_1 = arith.constant 0 : i32
    return %c0_i32, %c0_i32_0 : i32, i32
  }
  func.func @transform_9(%arg0: i32) -> (i32, i32) {
    %c0_i32 = arith.constant 0 : i32
    %c0_i32_0 = arith.constant 0 : i32
    %c0_i32_1 = arith.constant 0 : i32
    return %c0_i32, %c0_i32_0 : i32, i32
  }
  func.func @transform_10(%arg0: i32) -> (i32, i32) {
    %c0_i32 = arith.constant 0 : i32
    %c0_i32_0 = arith.constant 0 : i32
    return %arg0, %c0_i32 : i32, i32
  }
}

</mosaic_0001>

<llo_original>
// kernel: tpu_custom_call.1
$region0: #{tpu_custom_call.1}
  #allocation0 [shape = 'u32[]', space=smem, size = 0x4, offset = 0x4, fixed_abs, tag = 'smem constant byte address 0x4 - core index']
  #allocation1 [shape = 'u32[144,128]{1,0:T(1,128)}', space=vmem, size = 0x12000, scoped, tag = 'internal scratch']
  #allocation2 [shape = 'f32[1,1]{1,0:T(1,128)S(1)}', space=vmem, size = 0x200, scoped, tag = 'scoped memory for tpu_custom_call.1']
  %s0 = inlined_call_operand.vmem [shape: f32[8,16], index: 0, kind: input, shape index: {}]
  %s1 = inlined_call_operand.hbm [shape: f32[8,6], index: 1, kind: input, shape index: {}]
  %s2 = inlined_call_operand.vmem [shape: f32[1,6], index: 2, kind: input, shape index: {}]
  %s3 = inlined_call_operand.<no memory space> [shape: f32[1,1], index: 3, kind: input, shape index: {}]
  %s4 = inlined_call_operand.vmem [shape: f32[16,128], index: 4, kind: input, shape index: {}]
  %s5 = inlined_call_operand.vmem [shape: f32[1,128], index: 5, kind: input, shape index: {}]
  %s6 = inlined_call_operand.vmem [shape: f32[128,128], index: 6, kind: input, shape index: {}]
  %s7 = inlined_call_operand.hbm [shape: f32[1,128], index: 7, kind: input, shape index: {}]
  %s8 = inlined_call_operand.vmem [shape: f32[128,7], index: 8, kind: input, shape index: {}]
  %s9 = inlined_call_operand.vmem [shape: f32[1,7], index: 9, kind: input, shape index: {}]
  %s10 = inlined_call_operand.hbm [shape: f32[8,8], index: 10, kind: output, shape index: {}]
  %s11 = sld [smem:[#allocation0]]
  $region58: #{tpu_custom_call.1} parent=0
    _
  %s13 = ssub.s32 1, %s11
  %s14 = scalar_select 0, %s13, %s11
  %v15 = vstv %s3
  %16 = vst [vmem:[#allocation2] sm:$0x1] %v15
  $region1: #{tpu_custom_call.1} parent=0
    #allocation3 [shape = 'u8[4096]{0}', space=vmem, size = 0x1000, scoped, tag = 'input window, operand 1, single buffered']
    #allocation4 [shape = 's32[1]{0}', space=sflag, size = 0x4, scoped, tag = 'scoped memory for tpu_custom_call.1']
    #allocation5 [shape = 's32[1]{0}', space=sflag, size = 0x4, scoped, tag = 'scoped memory for tpu_custom_call.1']
    #allocation6 [shape = 'u8[512]{0}', space=vmem, size = 0x400, scoped, tag = 'input window, operand 7, single buffered']
    #allocation7 [shape = 's32[1]{0}', space=sflag, size = 0x4, scoped, tag = 'scoped memory for tpu_custom_call.1']
    #allocation8 [shape = 'u8[4096]{0}', space=vmem, size = 0x1000, scoped, tag = 'output window, operand 0, single buffered']
    %17 = vsyncpa [#allocation4], 0
    %18 = vsyncpa [#allocation7], 0
    %19 = vsyncpa [#allocation5], 0
    // Predicated region
    $region2: #{tpu_custom_call.1} parent=1 // pred_check
      _
    $region3: #{tpu_custom_call.1} parent=1 // pred_check_branch
      %21 = sbr.rel (0) target = $region5
    $region4: #{tpu_custom_call.1} parent=1 // pred_region
      _
    $region5: #{tpu_custom_call.1} parent=1 // pred_fallthru
      _
    // Predicated region
    $region6: #{tpu_custom_call.1} parent=1 // pred_check
      _
    $region7: #{tpu_custom_call.1} parent=1 // pred_check_branch
      %23 = sbr.rel (0) target = $region9
    $region8: #{tpu_custom_call.1} parent=1 // pred_region
      %s25 = ssub.s32 128, 128
      %26 = vsyncadd [#allocation4], %s25
      %s28 = sshll.u32 [#allocation3], 4
      %s29 = int_to_ptr.vmem [resolvable:$true] %s28
      %31 = dma.hbm_to_vmem [thread:$0]  %s1, 128, %s29, [#allocation4]
    $region9: #{tpu_custom_call.1} parent=1 // pred_fallthru
      _
    // Predicated region
    $region10: #{tpu_custom_call.1} parent=1 // pred_check
      _
    $region11: #{tpu_custom_call.1} parent=1 // pred_check_branch
      %33 = sbr.rel (0) target = $region13
    $region12: #{tpu_custom_call.1} parent=1 // pred_region
      _
    $region13: #{tpu_custom_call.1} parent=1 // pred_fallthru
      _
    // Predicated region
    $region14: #{tpu_custom_call.1} parent=1 // pred_check
      _
    $region15: #{tpu_custom_call.1} parent=1 // pred_check_branch
      %35 = sbr.rel (0) target = $region17
    $region16: #{tpu_custom_call.1} parent=1 // pred_region
      _
    $region17: #{tpu_custom_call.1} parent=1 // pred_fallthru
      _
    // Predicated region
    $region18: #{tpu_custom_call.1} parent=1 // pred_check
      _
    $region19: #{tpu_custom_call.1} parent=1 // pred_check_branch
      %37 = sbr.rel (0) target = $region21
    $region20: #{tpu_custom_call.1} parent=1 // pred_region
      _
    $region21: #{tpu_custom_call.1} parent=1 // pred_fallthru
      _
    // Predicated region
    $region22: #{tpu_custom_call.1} parent=1 // pred_check
      _
    $region23: #{tpu_custom_call.1} parent=1 // pred_check_branch
      %39 = sbr.rel (0) target = $region25
    $region24: #{tpu_custom_call.1} parent=1 // pred_region
      _
    $region25: #{tpu_custom_call.1} parent=1 // pred_fallthru
      _
    // Predicated region
    $region26: #{tpu_custom_call.1} parent=1 // pred_check
      _
    $region27: #{tpu_custom_call.1} parent=1 // pred_check_branch
      %41 = sbr.rel (0) target = $region29
    $region28: #{tpu_custom_call.1} parent=1 // pred_region
      _
    $region29: #{tpu_custom_call.1} parent=1 // pred_fallthru
      _
    // Predicated region
    $region30: #{tpu_custom_call.1} parent=1 // pred_check
      _
    $region31: #{tpu_custom_call.1} parent=1 // pred_check_branch
      %43 = sbr.rel (0) target = $region33
    $region32: #{tpu_custom_call.1} parent=1 // pred_region
      %s45 = ssub.s32 16, 16
      %46 = vsyncadd [#allocation7], %s45
      %s48 = sshll.u32 [#allocation6], 4
      %s49 = int_to_ptr.vmem [resolvable:$true] %s48
      %51 = dma.hbm_to_vmem [thread:$0]  %s7, 16, %s49, [#allocation7]
    $region33: #{tpu_custom_call.1} parent=1 // pred_fallthru
      _
    // Predicated region
    $region34: #{tpu_custom_call.1} parent=1 // pred_check
      _
    $region35: #{tpu_custom_call.1} parent=1 // pred_check_branch
      %53 = sbr.rel (0) target = $region37
    $region36: #{tpu_custom_call.1} parent=1 // pred_region
      _
    $region37: #{tpu_custom_call.1} parent=1 // pred_fallthru
      _
    // Predicated region
    $region38: #{tpu_custom_call.1} parent=1 // pred_check
      _
    $region39: #{tpu_custom_call.1} parent=1 // pred_check_branch
      %55 = sbr.rel (0) target = $region41
    $region40: #{tpu_custom_call.1} parent=1 // pred_region
      _
    $region41: #{tpu_custom_call.1} parent=1 // pred_fallthru
      _
    // Predicated region
    $region42: #{tpu_custom_call.1} parent=1 // pred_check
      _
    $region43: #{tpu_custom_call.1} parent=1 // pred_check_branch
      %57 = sbr.rel (0) target = $region45
    $region44: #{tpu_custom_call.1} parent=1 // pred_region
      %58 = dma.done [#allocation4], 128
    $region45: #{tpu_custom_call.1} parent=1 // pred_fallthru
      _
    // Predicated region
    $region46: #{tpu_custom_call.1} parent=1 // pred_check
      _
    $region47: #{tpu_custom_call.1} parent=1 // pred_check_branch
      %60 = sbr.rel (0) target = $region49
    $region48: #{tpu_custom_call.1} parent=1 // pred_region
      %61 = dma.done [#allocation7], 16
    $region49: #{tpu_custom_call.1} parent=1 // pred_fallthru
      _
    %v62 = vld [vmem:[%s0] sm:$0xff]
    %v63 = vld [vmem:[%s4] sm:$0xff]
    %v64 = vld [vmem:[%s4 + $0x8] sm:$0xff]
    %v65 = vld [vmem:[%s5] sm:$0x1]
    %v67 = vlaneseq
    %v68 = vshrl.u32 %v67, 7
    %v69 = vsub.s32 0, %v68
    %v70 = vrot.slane %v65, %v69
    %vm72 = vcmask 130048
    %v74 = vsel %vm72, %v62, 0
    %76 = vmatprep.subr.mxu0 0.0
    %77 = vmatpush1.msra.mxu0 %v63
    %78 = vmatprep.subr.mxu0 0.0
    %79 = vmatpush1.msra.mxu0 %v64
    %80 = vmatprep.subr.mxu0 0.0
    %81 = vmatpush1.msra.mxu0 0.0
    %82 = vmatprep.subr.mxu0 0.0
    %83 = vmatpush1.msra.mxu0 0.0
    %84 = vmatprep.subr.mxu0 0.0
    %85 = vmatpush1.msra.mxu0 0.0
    %86 = vmatprep.subr.mxu0 0.0
    %87 = vmatpush1.msra.mxu0 0.0
    %88 = vmatprep.subr.mxu0 0.0
    %89 = vmatpush1.msra.mxu0 0.0
    %90 = vmatprep.subr.mxu0 0.0
    %91 = vmatpush1.msra.mxu0 0.0
    %92 = vmatprep.subr.mxu0 0.0
    %93 = vmatpush1.msra.mxu0 0.0
    %94 = vmatprep.subr.mxu0 0.0
    %95 = vmatpush1.msra.mxu0 0.0
    %96 = vmatprep.subr.mxu0 0.0
    %97 = vmatpush1.msra.mxu0 0.0
    %98 = vmatprep.subr.mxu0 0.0
    %99 = vmatpush1.msra.mxu0 0.0
    %100 = vmatprep.subr.mxu0 0.0
    %101 = vmatpush1.msra.mxu0 0.0
    %102 = vmatprep.subr.mxu0 0.0
    %103 = vmatpush1.msra.mxu0 0.0
    %104 = vmatprep.subr.mxu0 0.0
    %105 = vmatpush1.msra.mxu0 0.0
    %106 = vmatprep.subr.mxu0 0.0
    %107 = vmatpush1.msra.mxu0 0.0
    %108 = vmatprep.subr.mxu0 0.0
    %109 = vmatpush1.msra.mxu0 0.0
    %110 = vmatprep.subr.mxu0 0.0
    %111 = vmatpush1.msra.mxu0 0.0
    %112 = vmatprep.subr.mxu0 0.0
    %113 = vmatpush1.msra.mxu0 0.0
    %114 = vmatprep.subr.mxu0 0.0
    %115 = vmatpush1.msra.mxu0 0.0
    %116 = vmatprep.subr.mxu0 0.0
    %117 = vmatpush1.msra.mxu0 0.0
    %118 = vmatprep.subr.mxu0 0.0
    %119 = vmatpush1.msra.mxu0 0.0
    %120 = vmatprep.subr.mxu0 0.0
    %121 = vmatpush1.msra.mxu0 0.0
    %122 = vmatprep.subr.mxu0 0.0
    %123 = vmatpush1.msra.mxu0 0.0
    %124 = vmatprep.subr.mxu0 0.0
    %125 = vmatpush1.msra.mxu0 0.0
    %126 = vmatprep.subr.mxu0 0.0
    %127 = vmatpush1.msra.mxu0 0.0
    %128 = vmatprep.subr.mxu0 0.0
    %129 = vmatpush1.msra.mxu0 0.0
    %130 = vmatprep.subr.mxu0 0.0
    %131 = vmatpush1.msra.mxu0 0.0
    %132 = vmatprep.subr.mxu0 0.0
    %133 = vmatpush1.msra.mxu0 0.0
    %134 = vmatprep.subr.mxu0 0.0
    %135 = vmatpush1.msra.mxu0 0.0
    %136 = vmatprep.subr.mxu0 0.0
    %137 = vmatpush1.msra.mxu0 0.0
    %138 = vmatprep.subr.mxu0 0.0
    %139 = vmatpush1.msra.mxu0 0.0
    %140 = vmatprep.mubr.f32.mxu0 0.0
    %141 = vmatmul.mubr.f32.gmra.mrb[0].mxu0 %v74
    %v142 = vpop.f32.mrb[0].mxu0
    %v143 = vadd.f32 %v70, %v142
    %v144 = vpop.f32.mrb[0].mxu0
    %145 = vdwg.mxu0
    %v146 = vtanh.pop %v143
    %v147 = vld [vmem:[%s6] sm:$0xff]
    %v148 = vld [vmem:[%s6 + $0x8] sm:$0xff]
    %v149 = vld [vmem:[%s6 + $0x10] sm:$0xff]
    %v150 = vld [vmem:[%s6 + $0x18] sm:$0xff]
    %v151 = vld [vmem:[%s6 + $0x20] sm:$0xff]
    %v152 = vld [vmem:[%s6 + $0x28] sm:$0xff]
    %v153 = vld [vmem:[%s6 + $0x30] sm:$0xff]
    %v154 = vld [vmem:[%s6 + $0x38] sm:$0xff]
    %v155 = vld [vmem:[%s6 + $0x40] sm:$0xff]
    %v156 = vld [vmem:[%s6 + $0x48] sm:$0xff]
    %v157 = vld [vmem:[%s6 + $0x50] sm:$0xff]
    %v158 = vld [vmem:[%s6 + $0x58] sm:$0xff]
    %v159 = vld [vmem:[%s6 + $0x60] sm:$0xff]
    %v160 = vld [vmem:[%s6 + $0x68] sm:$0xff]
    %v161 = vld [vmem:[%s6 + $0x70] sm:$0xff]
    %v162 = vld [vmem:[%s6 + $0x78] sm:$0xff]
    %v163 = vld [vmem:[#allocation6] sm:$0x1]
    %v165 = vlaneseq
    %v166 = vshrl.u32 %v165, 7
    %v167 = vsub.s32 0, %v166
    %v168 = vrot.slane %v163, %v167
    %170 = vmatprep.subr.mxu0 0.0
    %171 = vmatpush1.msra.mxu0 %v147
    %172 = vmatprep.subr.mxu0 0.0
    %173 = vmatpush1.msra.mxu0 %v148
    %174 = vmatprep.subr.mxu0 0.0
    %175 = vmatpush1.msra.mxu0 %v149
    %176 = vmatprep.subr.mxu0 0.0
    %177 = vmatpush1.msra.mxu0 %v150
    %178 = vmatprep.subr.mxu0 0.0
    %179 = vmatpush1.msra.mxu0 %v151
    %180 = vmatprep.subr.mxu0 0.0
    %181 = vmatpush1.msra.mxu0 %v152
    %182 = vmatprep.subr.mxu0 0.0
    %183 = vmatpush1.msra.mxu0 %v153
    %184 = vmatprep.subr.mxu0 0.0
    %185 = vmatpush1.msra.mxu0 %v154
    %186 = vmatprep.subr.mxu0 0.0
    %187 = vmatpush1.msra.mxu0 %v155
    %188 = vmatprep.subr.mxu0 0.0
    %189 = vmatpush1.msra.mxu0 %v156
    %190 = vmatprep.subr.mxu0 0.0
    %191 = vmatpush1.msra.mxu0 %v157
    %192 = vmatprep.subr.mxu0 0.0
    %193 = vmatpush1.msra.mxu0 %v158
    %194 = vmatprep.subr.mxu0 0.0
    %195 = vmatpush1.msra.mxu0 %v159
    %196 = vmatprep.subr.mxu0 0.0
    %197 = vmatpush1.msra.mxu0 %v160
    %198 = vmatprep.subr.mxu0 0.0
    %199 = vmatpush1.msra.mxu0 %v161
    %200 = vmatprep.subr.mxu0 0.0
    %201 = vmatpush1.msra.mxu0 %v162
    %202 = vmatprep.subr.mxu0 0.0
    %203 = vmatpush1.msra.mxu0 0.0
    %204 = vmatprep.subr.mxu0 0.0
    %205 = vmatpush1.msra.mxu0 0.0
    %206 = vmatprep.subr.mxu0 0.0
    %207 = vmatpush1.msra.mxu0 0.0
    %208 = vmatprep.subr.mxu0 0.0
    %209 = vmatpush1.msra.mxu0 0.0
    %210 = vmatprep.subr.mxu0 0.0
    %211 = vmatpush1.msra.mxu0 0.0
    %212 = vmatprep.subr.mxu0 0.0
    %213 = vmatpush1.msra.mxu0 0.0
    %214 = vmatprep.subr.mxu0 0.0
    %215 = vmatpush1.msra.mxu0 0.0
    %216 = vmatprep.subr.mxu0 0.0
    %217 = vmatpush1.msra.mxu0 0.0
    %218 = vmatprep.subr.mxu0 0.0
    %219 = vmatpush1.msra.mxu0 0.0
    %220 = vmatprep.subr.mxu0 0.0
    %221 = vmatpush1.msra.mxu0 0.0
    %222 = vmatprep.subr.mxu0 0.0
    %223 = vmatpush1.msra.mxu0 0.0
    %224 = vmatprep.subr.mxu0 0.0
    %225 = vmatpush1.msra.mxu0 0.0
    %226 = vmatprep.subr.mxu0 0.0
    %227 = vmatpush1.msra.mxu0 0.0
    %228 = vmatprep.subr.mxu0 0.0
    %229 = vmatpush1.msra.mxu0 0.0
    %230 = vmatprep.subr.mxu0 0.0
    %231 = vmatpush1.msra.mxu0 0.0
    %232 = vmatprep.subr.mxu0 0.0
    %233 = vmatpush1.msra.mxu0 0.0
    %234 = vmatprep.mubr.f32.mxu0 0.0
    %235 = vmatmul.mubr.f32.gmra.mrb[0].mxu0 %v146
    %v236 = vpop.f32.mrb[0].mxu0
    %v237 = vadd.f32 %v168, %v236
    %v238 = vpop.f32.mrb[0].mxu0
    %239 = vdwg.mxu0
    %v240 = vtanh.pop %v237
    %v241 = vld [vmem:[%s8] sm:$0xff]
    %v242 = vld [vmem:[%s8 + $0x8] sm:$0xff]
    %v243 = vld [vmem:[%s8 + $0x10] sm:$0xff]
    %v244 = vld [vmem:[%s8 + $0x18] sm:$0xff]
    %v245 = vld [vmem:[%s8 + $0x20] sm:$0xff]
    %v246 = vld [vmem:[%s8 + $0x28] sm:$0xff]
    %v247 = vld [vmem:[%s8 + $0x30] sm:$0xff]
    %v248 = vld [vmem:[%s8 + $0x38] sm:$0xff]
    %v249 = vld [vmem:[%s8 + $0x40] sm:$0xff]
    %v250 = vld [vmem:[%s8 + $0x48] sm:$0xff]
    %v251 = vld [vmem:[%s8 + $0x50] sm:$0xff]
    %v252 = vld [vmem:[%s8 + $0x58] sm:$0xff]
    %v253 = vld [vmem:[%s8 + $0x60] sm:$0xff]
    %v254 = vld [vmem:[%s8 + $0x68] sm:$0xff]
    %v255 = vld [vmem:[%s8 + $0x70] sm:$0xff]
    %v256 = vld [vmem:[%s8 + $0x78] sm:$0xff]
    %v257 = vld [vmem:[%s9] sm:$0x1]
    %v259 = vlaneseq
    %v260 = vshrl.u32 %v259, 7
    %v261 = vsub.s32 0, %v260
    %v262 = vrot.slane %v257, %v261
    %264 = vmatprep.subr.mxu0 0.0
    %265 = vmatpush1.msra.mxu0 %v241
    %266 = vmatprep.subr.mxu0 0.0
    %267 = vmatpush1.msra.mxu0 %v242
    %268 = vmatprep.subr.mxu0 0.0
    %269 = vmatpush1.msra.mxu0 %v243
    %270 = vmatprep.subr.mxu0 0.0
    %271 = vmatpush1.msra.mxu0 %v244
    %272 = vmatprep.subr.mxu0 0.0
    %273 = vmatpush1.msra.mxu0 %v245
    %274 = vmatprep.subr.mxu0 0.0
    %275 = vmatpush1.msra.mxu0 %v246
    %276 = vmatprep.subr.mxu0 0.0
    %277 = vmatpush1.msra.mxu0 %v247
    %278 = vmatprep.subr.mxu0 0.0
    %279 = vmatpush1.msra.mxu0 %v248
    %280 = vmatprep.subr.mxu0 0.0
    %281 = vmatpush1.msra.mxu0 %v249
    %282 = vmatprep.subr.mxu0 0.0
    %283 = vmatpush1.msra.mxu0 %v250
    %284 = vmatprep.subr.mxu0 0.0
    %285 = vmatpush1.msra.mxu0 %v251
    %286 = vmatprep.subr.mxu0 0.0
    %287 = vmatpush1.msra.mxu0 %v252
    %288 = vmatprep.subr.mxu0 0.0
    %289 = vmatpush1.msra.mxu0 %v253
    %290 = vmatprep.subr.mxu0 0.0
    %291 = vmatpush1.msra.mxu0 %v254
    %292 = vmatprep.subr.mxu0 0.0
    %293 = vmatpush1.msra.mxu0 %v255
    %294 = vmatprep.subr.mxu0 0.0
    %295 = vmatpush1.msra.mxu0 %v256
    %296 = vmatprep.subr.mxu0 0.0
    %297 = vmatpush1.msra.mxu0 0.0
    %298 = vmatprep.subr.mxu0 0.0
    %299 = vmatpush1.msra.mxu0 0.0
    %300 = vmatprep.subr.mxu0 0.0
    %301 = vmatpush1.msra.mxu0 0.0
    %302 = vmatprep.subr.mxu0 0.0
    %303 = vmatpush1.msra.mxu0 0.0
    %304 = vmatprep.subr.mxu0 0.0
    %305 = vmatpush1.msra.mxu0 0.0
    %306 = vmatprep.subr.mxu0 0.0
    %307 = vmatpush1.msra.mxu0 0.0
    %308 = vmatprep.subr.mxu0 0.0
    %309 = vmatpush1.msra.mxu0 0.0
    %310 = vmatprep.subr.mxu0 0.0
    %311 = vmatpush1.msra.mxu0 0.0
    %312 = vmatprep.subr.mxu0 0.0
    %313 = vmatpush1.msra.mxu0 0.0
    %314 = vmatprep.subr.mxu0 0.0
    %315 = vmatpush1.msra.mxu0 0.0
    %316 = vmatprep.subr.mxu0 0.0
    %317 = vmatpush1.msra.mxu0 0.0
    %318 = vmatprep.subr.mxu0 0.0
    %319 = vmatpush1.msra.mxu0 0.0
    %320 = vmatprep.subr.mxu0 0.0
    %321 = vmatpush1.msra.mxu0 0.0
    %322 = vmatprep.subr.mxu0 0.0
    %323 = vmatpush1.msra.mxu0 0.0
    %324 = vmatprep.subr.mxu0 0.0
    %325 = vmatpush1.msra.mxu0 0.0
    %326 = vmatprep.subr.mxu0 0.0
    %327 = vmatpush1.msra.mxu0 0.0
    %328 = vmatprep.mubr.f32.mxu0 0.0
    %329 = vmatmul.mubr.f32.gmra.mrb[0].mxu0 %v240
    %v330 = vpop.f32.mrb[0].mxu0
    %v331 = vadd.f32 %v262, %v330
    %v332 = vpop.f32.mrb[0].mxu0
    %333 = vdwg.mxu0
    %v334 = vtanh.pop %v331
    %v335 = vld [vmem:[#allocation3] sm:$0xff]
    %v336 = vsub.f32 %v335, %v334
    %v337 = vmul.f32 %v336, %v336
    %v338 = vld [vmem:[%s2] sm:$0x1]
    %v340 = vlaneseq
    %v341 = vshrl.u32 %v340, 7
    %v342 = vsub.s32 0, %v341
    %v343 = vrot.slane %v338, %v342
    %v345 = vmul.f32 %v337, %v343
    %vm346 = vcmask 48128
    %v347 = vsel %vm346, %v345, 0.0
    %348 = vadd.xlane.f32.xlu0 %v347
    %v349 = vpop.xlane.xlu0 %348
    %v350 = vld [vmem:[#allocation2] sm:$0x1]
    %v351 = vmul.f32 %v349, 0.5
    %v353 = vlaneseq
    %v354 = vshrl.u32 %v353, 7
    %v355 = vsub.s32 0, %v354
    %v356 = vrot.slane %v350, %v355
    %v358 = vsub.f32 %v356, %v351
    %359 = vst.msk [vmem:[#allocation8] sm:$0xff] %vm346, %v334
    %361 = vrot.lane.b32.xlu0 %v358, 6
    %v362 = vpop.permute.xlu0 %361
    %vm364 = vcmask 56368
    %365 = vst.msk [vmem:[#allocation8] sm:$0xff] %vm364, %v362
    %367 = vrot.lane.b32.xlu0 %v331, 1
    %v368 = vpop.permute.xlu0 %367
    %vm370 = vcmask 64568
    %371 = vst.msk [vmem:[#allocation8] sm:$0xff] %vm370, %v368
    // Predicated region
    $region50: #{tpu_custom_call.1} parent=1 // pred_check
      _
    $region51: #{tpu_custom_call.1} parent=1 // pred_check_branch
      %373 = sbr.rel (0) target = $region53
    $region52: #{tpu_custom_call.1} parent=1 // pred_region
      %s375 = ssub.s32 128, 128
      %376 = vsyncadd [#allocation5], %s375
      %s378 = sshll.u32 [#allocation8], 4
      %s379 = int_to_ptr.vmem [resolvable:$true] %s378
      %381 = dma.vmem_to_hbm [thread:$0]  %s379, 128, %s10, [#allocation5]
    $region53: #{tpu_custom_call.1} parent=1 // pred_fallthru
      _
    // Predicated region
    $region54: #{tpu_custom_call.1} parent=1 // pred_check
      _
    $region55: #{tpu_custom_call.1} parent=1 // pred_check_branch
      %383 = sbr.rel (0) target = $region57
    $region56: #{tpu_custom_call.1} parent=1 // pred_region
      %384 = dma.done [#allocation5], 128
    $region57: #{tpu_custom_call.1} parent=1 // pred_fallthru
      _
    %385 = vsyncpa [#allocation4], 1
    %386 = vsyncpa [#allocation7], 1
    %387 = vsyncpa [#allocation5], 1

</llo_original>
